<compile_context>
chip_gen: v5e
topology: v5e:2x2
jax: 0.10.0
libtpu: 0.0.40
codegen_flags: <defaults>
</compile_context>

<pallas_src>
import jax
import jax.numpy as jnp
from jax.experimental import pallas as pl
from jax.experimental.pallas import tpu as pltpu

K_IN = 784      # 1 * 28 * 28
K_PAD = 896     # 7 * 128 — lane-aligned K
H1 = 128
H2 = 64
OUT = 10


def mlp_kernel(x_ref, w1_ref, b1_ref, w2_ref, b2_ref, w3_ref, b3_ref, o_ref):
    # Whole problem fits in VMEM: full 3-layer MLP in one invocation.
    # Weights arrive as bf16 (cheap DMA) and are upcast to f32 for the dot;
    # activations / bias / ReLU stay f32 (v5e-safe VPU path, f32 accumulate).
    x = x_ref[...]                                           # (N, 896) f32
    h1 = jnp.dot(x, w1_ref[...].astype(jnp.float32),
                 preferred_element_type=jnp.float32) + b1_ref[...]
    h1 = jnp.maximum(h1, 0.0)
    h2 = jnp.dot(h1, w2_ref[...].astype(jnp.float32),
                 preferred_element_type=jnp.float32) + b2_ref[...]
    h2 = jnp.maximum(h2, 0.0)
    h3 = jnp.dot(h2, w3_ref[...].astype(jnp.float32),
                 preferred_element_type=jnp.float32) + b3_ref[...]
    h3 = jnp.maximum(h3, 0.0)                                # module has ReLU after fc2
    o_ref[...] = h3.astype(o_ref.dtype)


def mlp_forward(x_pad, w1, b1, w2, b2, w3, b3):
    n = x_pad.shape[0]
    out_dim = w3.shape[1]
    vmem = pl.BlockSpec(memory_space=pltpu.MemorySpace.VMEM)

    # Advisory cost hint: ~4 MFLOP, ~0.3 MB of traffic, no transcendentals.
    flops = 2 * n * (K_PAD * H1 + H1 * H2 + H2 * out_dim)
    bytes_accessed = (
        x_pad.size * 4                      # f32 input
        + (w1.size + w2.size + w3.size) * 2  # bf16 weights
        + (b1.size + b2.size + b3.size) * 4  # f32 biases
        + n * out_dim * 4                    # f32 output
    )
    return pl.pallas_call(
        mlp_kernel,
        out_shape=jax.ShapeDtypeStruct((n, out_dim), jnp.float32),
        in_specs=[vmem] * 7,
        out_specs=vmem,
        cost_estimate=pl.CostEstimate(
            flops=flops, bytes_accessed=bytes_accessed, transcendentals=0),
    )(x_pad, w1, b1, w2, b2, w3, b3)


def init_linear(key, fan_in, fan_out):
    # Mimics PyTorch nn.Linear default init: U(-1/sqrt(fan_in), 1/sqrt(fan_in)).
    kw, kb = jax.random.split(key)
    bound = 1.0 / jnp.sqrt(jnp.float32(fan_in))
    w = jax.random.uniform(kw, (fan_in, fan_out), jnp.float32, -bound, bound)
    b = jax.random.uniform(kb, (1, fan_out), jnp.float32, -bound, bound)
    return w, b


if __name__ == "__main__":
    key = jax.random.PRNGKey(0)
    kx, k1, k2, k3 = jax.random.split(key, 4)

    # Input matching the module: (16, 1, 28, 28) float32.
    x_nchw = jax.random.normal(kx, (16, 1, 28, 28), jnp.float32)
    x = x_nchw.reshape(x_nchw.shape[0], -1)                 # (16, 784)
    x_pad = jnp.pad(x, ((0, 0), (0, K_PAD - K_IN)))          # (16, 896)

    w1_f32, b1 = init_linear(k1, K_IN, H1)
    w2_f32, b2 = init_linear(k2, H1, H2)
    w3_f32, b3 = init_linear(k3, H2, OUT)

    # Zero-pad w1's K rows to 896 (exact: padded input columns are zero) and
    # store weights as bf16 in HBM — halves the dominant w1 DMA.
    w1_pad = jnp.pad(w1_f32, ((0, K_PAD - K_IN), (0, 0)))
    w1 = w1_pad.astype(jnp.bfloat16)
    w2 = w2_f32.astype(jnp.bfloat16)
    w3 = w3_f32.astype(jnp.bfloat16)

    out = mlp_forward(x_pad, w1, b1, w2, b2, w3, b3)
    out = jax.block_until_ready(out)

    # Reference in plain JAX using the SAME bf16-rounded weights (f32 math),
    # so only MXU-vs-XLA accumulation order differs.
    w1r = w1.astype(jnp.float32)
    w2r = w2.astype(jnp.float32)
    w3r = w3.astype(jnp.float32)
    ref = jnp.maximum(x_pad @ w1r + b1, 0.0)
    ref = jnp.maximum(ref @ w2r + b2, 0.0)
    ref = jnp.maximum(ref @ w3r + b3, 0.0)

    assert out.shape == (16, OUT)
    assert jnp.allclose(out, ref, atol=1e-3, rtol=1e-3), (
        float(jnp.max(jnp.abs(out - ref))))

    print("KERNEL_OK")
</pallas_src>

<mosaic_0001>
module attributes {stable_mosaic.version = 11 : i64} {
  func.func @mlp_kernel(%arg0: memref<16x896xf32, #tpu.memory_space<vmem>>, %arg1: memref<896x128xbf16, #tpu.memory_space<vmem>>, %arg2: memref<1x128xf32, #tpu.memory_space<vmem>>, %arg3: memref<128x64xbf16, #tpu.memory_space<vmem>>, %arg4: memref<1x64xf32, #tpu.memory_space<vmem>>, %arg5: memref<64x10xbf16, #tpu.memory_space<vmem>>, %arg6: memref<1x10xf32, #tpu.memory_space<vmem>>, %arg7: memref<16x10xf32, #tpu.memory_space<vmem>>) attributes {dimension_semantics = [], scalar_prefetch = 0 : i64, scratch_operands = 0 : i64, tpu.core_type = #tpu.core_type<tc>} {
    %c0 = arith.constant 0 : index
    %c0_0 = arith.constant 0 : index
    %0 = vector.load %arg0[%c0, %c0_0] : memref<16x896xf32, #tpu.memory_space<vmem>>, vector<16x896xf32>
    %c0_1 = arith.constant 0 : index
    %c0_2 = arith.constant 0 : index
    %1 = vector.load %arg1[%c0_1, %c0_2] : memref<896x128xbf16, #tpu.memory_space<vmem>>, vector<896x128xbf16>
    %2 = arith.extf %1 : vector<896x128xbf16> to vector<896x128xf32>
    %cst = arith.constant dense<0.000000e+00> : vector<16x128xf32>
    %3 = tpu.matmul %0, %2, %cst {dimension_numbers = #tpu.dot_dimension_numbers<[1], [0], [0], [1], [0, 0, 1, 1], [], []>} : vector<16x896xf32>, vector<896x128xf32>, vector<16x128xf32> -> vector<16x128xf32>
    %c0_3 = arith.constant 0 : index
    %c0_4 = arith.constant 0 : index
    %4 = vector.load %arg2[%c0_3, %c0_4] : memref<1x128xf32, #tpu.memory_space<vmem>>, vector<1x128xf32>
    %5 = vector.broadcast %4 : vector<1x128xf32> to vector<16x128xf32>
    %6 = arith.addf %3, %5 : vector<16x128xf32>
    %cst_5 = arith.constant 0.000000e+00 : f32
    %7 = vector.broadcast %cst_5 : f32 to vector<16x128xf32>
    %8 = arith.maximumf %6, %7 : vector<16x128xf32>
    %c0_6 = arith.constant 0 : index
    %c0_7 = arith.constant 0 : index
    %9 = vector.load %arg3[%c0_6, %c0_7] : memref<128x64xbf16, #tpu.memory_space<vmem>>, vector<128x64xbf16>
    %10 = arith.extf %9 : vector<128x64xbf16> to vector<128x64xf32>
    %cst_8 = arith.constant dense<0.000000e+00> : vector<16x64xf32>
    %11 = tpu.matmul %8, %10, %cst_8 {dimension_numbers = #tpu.dot_dimension_numbers<[1], [0], [0], [1], [0, 0, 1, 1], [], []>} : vector<16x128xf32>, vector<128x64xf32>, vector<16x64xf32> -> vector<16x64xf32>
    %c0_9 = arith.constant 0 : index
    %c0_10 = arith.constant 0 : index
    %12 = vector.load %arg4[%c0_9, %c0_10] : memref<1x64xf32, #tpu.memory_space<vmem>>, vector<1x64xf32>
    %13 = vector.broadcast %12 : vector<1x64xf32> to vector<16x64xf32>
    %14 = arith.addf %11, %13 : vector<16x64xf32>
    %cst_11 = arith.constant 0.000000e+00 : f32
    %15 = vector.broadcast %cst_11 : f32 to vector<16x64xf32>
    %16 = arith.maximumf %14, %15 : vector<16x64xf32>
    %c0_12 = arith.constant 0 : index
    %c0_13 = arith.constant 0 : index
    %17 = vector.load %arg5[%c0_12, %c0_13] : memref<64x10xbf16, #tpu.memory_space<vmem>>, vector<64x10xbf16>
    %18 = arith.extf %17 : vector<64x10xbf16> to vector<64x10xf32>
    %cst_14 = arith.constant dense<0.000000e+00> : vector<16x10xf32>
    %19 = tpu.matmul %16, %18, %cst_14 {dimension_numbers = #tpu.dot_dimension_numbers<[1], [0], [0], [1], [0, 0, 1, 1], [], []>} : vector<16x64xf32>, vector<64x10xf32>, vector<16x10xf32> -> vector<16x10xf32>
    %c0_15 = arith.constant 0 : index
    %c0_16 = arith.constant 0 : index
    %20 = vector.load %arg6[%c0_15, %c0_16] : memref<1x10xf32, #tpu.memory_space<vmem>>, vector<1x10xf32>
    %21 = vector.broadcast %20 : vector<1x10xf32> to vector<16x10xf32>
    %22 = arith.addf %19, %21 : vector<16x10xf32>
    %cst_17 = arith.constant 0.000000e+00 : f32
    %23 = vector.broadcast %cst_17 : f32 to vector<16x10xf32>
    %24 = arith.maximumf %22, %23 : vector<16x10xf32>
    %c0_18 = arith.constant 0 : index
    %c0_19 = arith.constant 0 : index
    %25 = vector.load %arg7[%c0_18, %c0_19] : memref<16x10xf32, #tpu.memory_space<vmem>>, vector<16x10xf32>
    tpu.vector_store %arg7[%c0_18, %c0_19], %24 {strides = array<i32>} : memref<16x10xf32, #tpu.memory_space<vmem>>, vector<16x10xf32>,
    return
  }
}

</mosaic_0001>

<llo_original>
// kernel: tpu_custom_call.1
$region0: #{tpu_custom_call.1}
  #allocation0 [shape = 'u32[]', space=smem, size = 0x4, offset = 0x4, fixed_abs, tag = 'smem constant byte address 0x4 - core index']
  #allocation1 [shape = 'u32[72,128]{1,0:T(1,128)}', space=vmem, size = 0x9000, scoped, tag = 'internal scratch']
  %s0 = inlined_call_operand.vmem [shape: f32[16,896], index: 0, kind: input, shape index: {}]
  %s1 = inlined_call_operand.hbm [shape: bf16[896,128], index: 1, kind: input, shape index: {}]
  %s2 = inlined_call_operand.vmem [shape: f32[1,128], index: 2, kind: input, shape index: {}]
  %s3 = inlined_call_operand.vmem [shape: bf16[128,64], index: 3, kind: input, shape index: {}]
  %s4 = inlined_call_operand.vmem [shape: f32[1,64], index: 4, kind: input, shape index: {}]
  %s5 = inlined_call_operand.vmem [shape: bf16[64,10], index: 5, kind: input, shape index: {}]
  %s6 = inlined_call_operand.vmem [shape: f32[1,10], index: 6, kind: input, shape index: {}]
  %s7 = inlined_call_operand.hbm [shape: f32[16,10], index: 7, kind: output, shape index: {}]
  %s8 = sld [smem:[#allocation0]]
  $region42: #{tpu_custom_call.1} parent=0
    _
  %s10 = ssub.s32 1, %s8
  %s11 = scalar_select 0, %s10, %s8
  $region1: #{tpu_custom_call.1} parent=0
    #allocation2 [shape = 'u8[229376]{0}', space=vmem, size = 0x38000, scoped, tag = 'input window, operand 1, single buffered']
    #allocation3 [shape = 's32[1]{0}', space=sflag, size = 0x4, scoped, tag = 'scoped memory for tpu_custom_call.1']
    #allocation4 [shape = 's32[1]{0}', space=sflag, size = 0x4, scoped, tag = 'scoped memory for tpu_custom_call.1']
    #allocation5 [shape = 'u8[8192]{0}', space=vmem, size = 0x2000, scoped, tag = 'output window, operand 0, single buffered']
    %12 = vsyncpa [#allocation3], 0
    %13 = vsyncpa [#allocation4], 0
    // Predicated region
    $region2: #{tpu_custom_call.1} parent=1 // pred_check
      _
    $region3: #{tpu_custom_call.1} parent=1 // pred_check_branch
      %15 = sbr.rel (0) target = $region5
    $region4: #{tpu_custom_call.1} parent=1 // pred_region
      _
    $region5: #{tpu_custom_call.1} parent=1 // pred_fallthru
      _
    // Predicated region
    $region6: #{tpu_custom_call.1} parent=1 // pred_check
      _
    $region7: #{tpu_custom_call.1} parent=1 // pred_check_branch
      %17 = sbr.rel (0) target = $region9
    $region8: #{tpu_custom_call.1} parent=1 // pred_region
      %19 = vsyncadd [#allocation3], 0
      %s20 = sshll.u32 %s1, 4
      %s21 = int_to_ptr.hbm [resolvable:$true] %s20
      %s22 = sshll.u32 [#allocation2], 4
      %s23 = int_to_ptr.vmem [resolvable:$true] %s22
      %28 = dma.hbm_to_vmem [thread:$0]  %s21, 7168, %s23, [#allocation3], 64, 64, 4
    $region9: #{tpu_custom_call.1} parent=1 // pred_fallthru
      _
    // Predicated region
    $region10: #{tpu_custom_call.1} parent=1 // pred_check
      _
    $region11: #{tpu_custom_call.1} parent=1 // pred_check_branch
      %30 = sbr.rel (0) target = $region13
    $region12: #{tpu_custom_call.1} parent=1 // pred_region
      _
    $region13: #{tpu_custom_call.1} parent=1 // pred_fallthru
      _
    // Predicated region
    $region14: #{tpu_custom_call.1} parent=1 // pred_check
      _
    $region15: #{tpu_custom_call.1} parent=1 // pred_check_branch
      %32 = sbr.rel (0) target = $region17
    $region16: #{tpu_custom_call.1} parent=1 // pred_region
      _
    $region17: #{tpu_custom_call.1} parent=1 // pred_fallthru
      _
    // Predicated region
    $region18: #{tpu_custom_call.1} parent=1 // pred_check
      _
    $region19: #{tpu_custom_call.1} parent=1 // pred_check_branch
      %34 = sbr.rel (0) target = $region21
    $region20: #{tpu_custom_call.1} parent=1 // pred_region
      _
    $region21: #{tpu_custom_call.1} parent=1 // pred_fallthru
      _
    // Predicated region
    $region22: #{tpu_custom_call.1} parent=1 // pred_check
      _
    $region23: #{tpu_custom_call.1} parent=1 // pred_check_branch
      %36 = sbr.rel (0) target = $region25
    $region24: #{tpu_custom_call.1} parent=1 // pred_region
      _
    $region25: #{tpu_custom_call.1} parent=1 // pred_fallthru
      _
    // Predicated region
    $region26: #{tpu_custom_call.1} parent=1 // pred_check
      _
    $region27: #{tpu_custom_call.1} parent=1 // pred_check_branch
      %38 = sbr.rel (0) target = $region29
    $region28: #{tpu_custom_call.1} parent=1 // pred_region
      _
    $region29: #{tpu_custom_call.1} parent=1 // pred_fallthru
      _
    // Predicated region
    $region30: #{tpu_custom_call.1} parent=1 // pred_check
      _
    $region31: #{tpu_custom_call.1} parent=1 // pred_check_branch
      %40 = sbr.rel (0) target = $region33
    $region32: #{tpu_custom_call.1} parent=1 // pred_region
      %42 = dma.done [#allocation3], 7168
    $region33: #{tpu_custom_call.1} parent=1 // pred_fallthru
      _
    %v43 = vld [vmem:[%s0] sm:$0xff]
    %v44 = vld [vmem:[%s0 + $0x8] sm:$0xff]
    %v45 = vld [vmem:[%s0 + $0x10] sm:$0xff]
    %v46 = vld [vmem:[%s0 + $0x18] sm:$0xff]
    %v47 = vld [vmem:[%s0 + $0x20] sm:$0xff]
    %v48 = vld [vmem:[%s0 + $0x28] sm:$0xff]
    %v49 = vld [vmem:[%s0 + $0x30] sm:$0xff]
    %v50 = vld [vmem:[%s0 + $0x38] sm:$0xff]
    %v51 = vld [vmem:[%s0 + $0x40] sm:$0xff]
    %v52 = vld [vmem:[%s0 + $0x48] sm:$0xff]
    %v53 = vld [vmem:[%s0 + $0x50] sm:$0xff]
    %v54 = vld [vmem:[%s0 + $0x58] sm:$0xff]
    %v55 = vld [vmem:[%s0 + $0x60] sm:$0xff]
    %v56 = vld [vmem:[%s0 + $0x68] sm:$0xff]
    %v57 = vld [vmem:[#allocation2] sm:$0xf]
    %v58 = vld [vmem:[#allocation2 + $0x4] sm:$0xf]
    %v59 = vld [vmem:[#allocation2 + $0x8] sm:$0xf]
    %v60 = vld [vmem:[#allocation2 + $0xc] sm:$0xf]
    %v61 = vld [vmem:[#allocation2 + $0x10] sm:$0xf]
    %v62 = vld [vmem:[#allocation2 + $0x14] sm:$0xf]
    %v63 = vld [vmem:[#allocation2 + $0x18] sm:$0xf]
    %v64 = vld [vmem:[#allocation2 + $0x1c] sm:$0xf]
    %v65 = vld [vmem:[#allocation2 + $0x20] sm:$0xf]
    %v66 = vld [vmem:[#allocation2 + $0x24] sm:$0xf]
    %v67 = vld [vmem:[#allocation2 + $0x28] sm:$0xf]
    %v68 = vld [vmem:[#allocation2 + $0x2c] sm:$0xf]
    %v69 = vld [vmem:[#allocation2 + $0x30] sm:$0xf]
    %v70 = vld [vmem:[#allocation2 + $0x34] sm:$0xf]
    %v71 = vld [vmem:[#allocation2 + $0x38] sm:$0xf]
    %v72 = vld [vmem:[#allocation2 + $0x3c] sm:$0xf]
    %v73 = vld [vmem:[#allocation2 + $0x40] sm:$0xf]
    %v74 = vld [vmem:[#allocation2 + $0x44] sm:$0xf]
    %v75 = vld [vmem:[#allocation2 + $0x48] sm:$0xf]
    %v76 = vld [vmem:[#allocation2 + $0x4c] sm:$0xf]
    %v77 = vld [vmem:[#allocation2 + $0x50] sm:$0xf]
    %v78 = vld [vmem:[#allocation2 + $0x54] sm:$0xf]
    %v79 = vld [vmem:[#allocation2 + $0x58] sm:$0xf]
    %v80 = vld [vmem:[#allocation2 + $0x5c] sm:$0xf]
    %v81 = vld [vmem:[#allocation2 + $0x60] sm:$0xf]
    %v82 = vld [vmem:[#allocation2 + $0x64] sm:$0xf]
    %v83 = vld [vmem:[#allocation2 + $0x68] sm:$0xf]
    %v84 = vld [vmem:[#allocation2 + $0x6c] sm:$0xf]
    %v85 = vld [vmem:[#allocation2 + $0x70] sm:$0xf]
    %v86 = vld [vmem:[#allocation2 + $0x74] sm:$0xf]
    %v87 = vld [vmem:[#allocation2 + $0x78] sm:$0xf]
    %v88 = vld [vmem:[#allocation2 + $0x7c] sm:$0xf]
    %v89 = vld [vmem:[#allocation2 + $0x80] sm:$0xf]
    %v90 = vld [vmem:[#allocation2 + $0x84] sm:$0xf]
    %v91 = vld [vmem:[#allocation2 + $0x88] sm:$0xf]
    %v92 = vld [vmem:[#allocation2 + $0x8c] sm:$0xf]
    %v93 = vld [vmem:[#allocation2 + $0x90] sm:$0xf]
    %v94 = vld [vmem:[#allocation2 + $0x94] sm:$0xf]
    %v95 = vld [vmem:[#allocation2 + $0x98] sm:$0xf]
    %v96 = vld [vmem:[#allocation2 + $0x9c] sm:$0xf]
    %v97 = vld [vmem:[#allocation2 + $0xa0] sm:$0xf]
    %v98 = vld [vmem:[#allocation2 + $0xa4] sm:$0xf]
    %v99 = vld [vmem:[#allocation2 + $0xa8] sm:$0xf]
    %v100 = vld [vmem:[#allocation2 + $0xac] sm:$0xf]
    %v101 = vld [vmem:[#allocation2 + $0xb0] sm:$0xf]
    %v102 = vld [vmem:[#allocation2 + $0xb4] sm:$0xf]
    %v103 = vld [vmem:[#allocation2 + $0xb8] sm:$0xf]
    %v104 = vld [vmem:[#allocation2 + $0xbc] sm:$0xf]
    %v105 = vld [vmem:[#allocation2 + $0xc0] sm:$0xf]
    %v106 = vld [vmem:[#allocation2 + $0xc4] sm:$0xf]
    %v107 = vld [vmem:[#allocation2 + $0xc8] sm:$0xf]
    %v108 = vld [vmem:[#allocation2 + $0xcc] sm:$0xf]
    %v109 = vld [vmem:[#allocation2 + $0xd0] sm:$0xf]
    %v110 = vld [vmem:[#allocation2 + $0xd4] sm:$0xf]
    %v111 = vld [vmem:[#allocation2 + $0xd8] sm:$0xf]
    %v112 = vld [vmem:[#allocation2 + $0xdc] sm:$0xf]
    %v113 = vld [vmem:[#allocation2 + $0xe0] sm:$0xf]
    %v114 = vld [vmem:[#allocation2 + $0xe4] sm:$0xf]
    %v115 = vld [vmem:[#allocation2 + $0xe8] sm:$0xf]
    %v116 = vld [vmem:[#allocation2 + $0xec] sm:$0xf]
    %v117 = vld [vmem:[#allocation2 + $0xf0] sm:$0xf]
    %v118 = vld [vmem:[#allocation2 + $0xf4] sm:$0xf]
    %v119 = vld [vmem:[#allocation2 + $0xf8] sm:$0xf]
    %v120 = vld [vmem:[#allocation2 + $0xfc] sm:$0xf]
    %v121 = vld [vmem:[#allocation2 + $0x100] sm:$0xf]
    %v122 = vld [vmem:[#allocation2 + $0x104] sm:$0xf]
    %v123 = vld [vmem:[#allocation2 + $0x108] sm:$0xf]
    %v124 = vld [vmem:[#allocation2 + $0x10c] sm:$0xf]
    %v125 = vld [vmem:[#allocation2 + $0x110] sm:$0xf]
    %v126 = vld [vmem:[#allocation2 + $0x114] sm:$0xf]
    %v127 = vld [vmem:[#allocation2 + $0x118] sm:$0xf]
    %v128 = vld [vmem:[#allocation2 + $0x11c] sm:$0xf]
    %v129 = vld [vmem:[#allocation2 + $0x120] sm:$0xf]
    %v130 = vld [vmem:[#allocation2 + $0x124] sm:$0xf]
    %v131 = vld [vmem:[#allocation2 + $0x128] sm:$0xf]
    %v132 = vld [vmem:[#allocation2 + $0x12c] sm:$0xf]
    %v133 = vld [vmem:[#allocation2 + $0x130] sm:$0xf]
    %v134 = vld [vmem:[#allocation2 + $0x134] sm:$0xf]
    %v135 = vld [vmem:[#allocation2 + $0x138] sm:$0xf]
    %v136 = vld [vmem:[#allocation2 + $0x13c] sm:$0xf]
    %v137 = vld [vmem:[#allocation2 + $0x140] sm:$0xf]
    %v138 = vld [vmem:[#allocation2 + $0x144] sm:$0xf]
    %v139 = vld [vmem:[#allocation2 + $0x148] sm:$0xf]
    %v140 = vld [vmem:[#allocation2 + $0x14c] sm:$0xf]
    %v141 = vld [vmem:[#allocation2 + $0x150] sm:$0xf]
    %v142 = vld [vmem:[#allocation2 + $0x154] sm:$0xf]
    %v143 = vld [vmem:[#allocation2 + $0x158] sm:$0xf]
    %v144 = vld [vmem:[#allocation2 + $0x15c] sm:$0xf]
    %v145 = vld [vmem:[#allocation2 + $0x160] sm:$0xf]
    %v146 = vld [vmem:[#allocation2 + $0x164] sm:$0xf]
    %v147 = vld [vmem:[#allocation2 + $0x168] sm:$0xf]
    %v148 = vld [vmem:[#allocation2 + $0x16c] sm:$0xf]
    %v149 = vld [vmem:[#allocation2 + $0x170] sm:$0xf]
    %v150 = vld [vmem:[#allocation2 + $0x174] sm:$0xf]
    %v151 = vld [vmem:[#allocation2 + $0x178] sm:$0xf]
    %v152 = vld [vmem:[#allocation2 + $0x17c] sm:$0xf]
    %v153 = vld [vmem:[#allocation2 + $0x180] sm:$0xf]
    %v154 = vld [vmem:[#allocation2 + $0x184] sm:$0xf]
    %v155 = vld [vmem:[#allocation2 + $0x188] sm:$0xf]
    %v156 = vld [vmem:[#allocation2 + $0x18c] sm:$0xf]
    %v157 = vld [vmem:[#allocation2 + $0x190] sm:$0xf]
    %v158 = vld [vmem:[#allocation2 + $0x194] sm:$0xf]
    %v159 = vld [vmem:[#allocation2 + $0x198] sm:$0xf]
    %v160 = vld [vmem:[#allocation2 + $0x19c] sm:$0xf]
    %v161 = vld [vmem:[#allocation2 + $0x1a0] sm:$0xf]
    %v162 = vld [vmem:[#allocation2 + $0x1a4] sm:$0xf]
    %v163 = vld [vmem:[#allocation2 + $0x1a8] sm:$0xf]
    %v164 = vld [vmem:[#allocation2 + $0x1ac] sm:$0xf]
    %v165 = vld [vmem:[#allocation2 + $0x1b0] sm:$0xf]
    %v166 = vld [vmem:[#allocation2 + $0x1b4] sm:$0xf]
    %v167 = vld [vmem:[#allocation2 + $0x1b8] sm:$0xf]
    %v168 = vld [vmem:[#allocation2 + $0x1bc] sm:$0xf]
    %v169 = vunpack.c.l.bf16 %v57
    %v170 = vunpack.c.l.bf16 %v58
    %v171 = vunpack.c.l.bf16 %v59
    %v172 = vunpack.c.l.bf16 %v60
    %v173 = vunpack.c.l.bf16 %v61
    %v174 = vunpack.c.l.bf16 %v62
    %v175 = vunpack.c.l.bf16 %v63
    %v176 = vunpack.c.l.bf16 %v64
    %v177 = vunpack.c.l.bf16 %v65
    %v178 = vunpack.c.l.bf16 %v66
    %v179 = vunpack.c.l.bf16 %v67
    %v180 = vunpack.c.l.bf16 %v68
    %v181 = vunpack.c.l.bf16 %v69
    %v182 = vunpack.c.l.bf16 %v70
    %v183 = vunpack.c.l.bf16 %v71
    %v184 = vunpack.c.l.bf16 %v72
    %v185 = vunpack.c.l.bf16 %v73
    %v186 = vunpack.c.l.bf16 %v74
    %v187 = vunpack.c.l.bf16 %v75
    %v188 = vunpack.c.l.bf16 %v76
    %v189 = vunpack.c.l.bf16 %v77
    %v190 = vunpack.c.l.bf16 %v78
    %v191 = vunpack.c.l.bf16 %v79
    %v192 = vunpack.c.l.bf16 %v80
    %v193 = vunpack.c.l.bf16 %v81
    %v194 = vunpack.c.l.bf16 %v82
    %v195 = vunpack.c.l.bf16 %v83
    %v196 = vunpack.c.l.bf16 %v84
    %v197 = vunpack.c.l.bf16 %v85
    %v198 = vunpack.c.l.bf16 %v86
    %v199 = vunpack.c.l.bf16 %v87
    %v200 = vunpack.c.l.bf16 %v88
    %v201 = vunpack.c.l.bf16 %v89
    %v202 = vunpack.c.l.bf16 %v90
    %v203 = vunpack.c.l.bf16 %v91
    %v204 = vunpack.c.l.bf16 %v92
    %v205 = vunpack.c.l.bf16 %v93
    %v206 = vunpack.c.l.bf16 %v94
    %v207 = vunpack.c.l.bf16 %v95
    %v208 = vunpack.c.l.bf16 %v96
    %v209 = vunpack.c.l.bf16 %v97
    %v210 = vunpack.c.l.bf16 %v98
    %v211 = vunpack.c.l.bf16 %v99
    %v212 = vunpack.c.l.bf16 %v100
    %v213 = vunpack.c.l.bf16 %v101
    %v214 = vunpack.c.l.bf16 %v102
    %v215 = vunpack.c.l.bf16 %v103
    %v216 = vunpack.c.l.bf16 %v104
    %v217 = vunpack.c.l.bf16 %v105
    %v218 = vunpack.c.l.bf16 %v106
    %v219 = vunpack.c.l.bf16 %v107
    %v220 = vunpack.c.l.bf16 %v108
    %v221 = vunpack.c.l.bf16 %v109
    %v222 = vunpack.c.l.bf16 %v110
    %v223 = vunpack.c.l.bf16 %v111
    %v224 = vunpack.c.l.bf16 %v112
    %v225 = vunpack.c.l.bf16 %v113
    %v226 = vunpack.c.l.bf16 %v114
    %v227 = vunpack.c.l.bf16 %v115
    %v228 = vunpack.c.l.bf16 %v116
    %v229 = vunpack.c.l.bf16 %v117
    %v230 = vunpack.c.l.bf16 %v118
    %v231 = vunpack.c.l.bf16 %v119
    %v232 = vunpack.c.l.bf16 %v120
    %v233 = vunpack.c.l.bf16 %v121
    %v234 = vunpack.c.l.bf16 %v122
    %v235 = vunpack.c.l.bf16 %v123
    %v236 = vunpack.c.l.bf16 %v124
    %v237 = vunpack.c.l.bf16 %v125
    %v238 = vunpack.c.l.bf16 %v126
    %v239 = vunpack.c.l.bf16 %v127
    %v240 = vunpack.c.l.bf16 %v128
    %v241 = vunpack.c.l.bf16 %v129
    %v242 = vunpack.c.l.bf16 %v130
    %v243 = vunpack.c.l.bf16 %v131
    %v244 = vunpack.c.l.bf16 %v132
    %v245 = vunpack.c.l.bf16 %v133
    %v246 = vunpack.c.l.bf16 %v134
    %v247 = vunpack.c.l.bf16 %v135
    %v248 = vunpack.c.l.bf16 %v136
    %v249 = vunpack.c.l.bf16 %v137
    %v250 = vunpack.c.l.bf16 %v138
    %v251 = vunpack.c.l.bf16 %v139
    %v252 = vunpack.c.l.bf16 %v140
    %v253 = vunpack.c.l.bf16 %v141
    %v254 = vunpack.c.l.bf16 %v142
    %v255 = vunpack.c.l.bf16 %v143
    %v256 = vunpack.c.l.bf16 %v144
    %v257 = vunpack.c.l.bf16 %v145
    %v258 = vunpack.c.l.bf16 %v146
    %v259 = vunpack.c.l.bf16 %v147
    %v260 = vunpack.c.l.bf16 %v148
    %v261 = vunpack.c.l.bf16 %v149
    %v262 = vunpack.c.l.bf16 %v150
    %v263 = vunpack.c.l.bf16 %v151
    %v264 = vunpack.c.l.bf16 %v152
    %v265 = vunpack.c.l.bf16 %v153
    %v266 = vunpack.c.l.bf16 %v154
    %v267 = vunpack.c.l.bf16 %v155
    %v268 = vunpack.c.l.bf16 %v156
    %v269 = vunpack.c.l.bf16 %v157
    %v270 = vunpack.c.l.bf16 %v158
    %v271 = vunpack.c.l.bf16 %v159
    %v272 = vunpack.c.l.bf16 %v160
    %v273 = vunpack.c.l.bf16 %v161
    %v274 = vunpack.c.l.bf16 %v162
    %v275 = vunpack.c.l.bf16 %v163
    %v276 = vunpack.c.l.bf16 %v164
    %v277 = vunpack.c.l.bf16 %v165
    %v278 = vunpack.c.l.bf16 %v166
    %v279 = vunpack.c.l.bf16 %v167
    %v280 = vunpack.c.l.bf16 %v168
    %v281 = vld [vmem:[%s2] sm:$0x1]
    %v283 = vperm.slane %v281, 0
    %285 = vmatpush.msra.mxu0 %v184
    %286 = vmatpush.msra.mxu0 %v183
    %287 = vmatpush.msra.mxu0 %v182
    %288 = vmatpush.msra.mxu0 %v181
    %289 = vmatpush.msra.mxu0 %v180
    %290 = vmatpush.msra.mxu0 %v179
    %291 = vmatpush.msra.mxu0 %v178
    %292 = vmatpush.msra.mxu0 %v177
    %293 = vmatpush.msra.mxu0 %v176
    %294 = vmatpush.msra.mxu0 %v175
    %295 = vmatpush.msra.mxu0 %v174
    %296 = vmatpush.msra.mxu0 %v173
    %297 = vmatpush.msra.mxu0 %v172
    %298 = vmatpush.msra.mxu0 %v171
    %299 = vmatpush.msra.mxu0 %v170
    %300 = vmatpush.msra.mxu0 %v169
    %301 = vmatmul.f32.gmra.mxu0 %v43
    %v302 = vpop.f32.mrf.mxu0
    %v303 = vadd.f32 %v283, %v302
    %304 = vmatmul.f32.gmra.mxu0 %v50
    %v305 = vpop.f32.mrf.mxu0
    %v306 = vadd.f32 %v283, %v305
    %307 = vdwg.mxu0
    %308 = vmatpush.msra.mxu0 %v200
    %309 = vmatpush.msra.mxu0 %v199
    %310 = vmatpush.msra.mxu0 %v198
    %311 = vmatpush.msra.mxu0 %v197
    %312 = vmatpush.msra.mxu0 %v196
    %313 = vmatpush.msra.mxu0 %v195
    %314 = vmatpush.msra.mxu0 %v194
    %315 = vmatpush.msra.mxu0 %v193
    %316 = vmatpush.msra.mxu0 %v192
    %317 = vmatpush.msra.mxu0 %v191
    %318 = vmatpush.msra.mxu0 %v190
    %319 = vmatpush.msra.mxu0 %v189
    %320 = vmatpush.msra.mxu0 %v188
    %321 = vmatpush.msra.mxu0 %v187
    %322 = vmatpush.msra.mxu0 %v186
    %323 = vmatpush.msra.mxu0 %v185
    %324 = vmatmul.f32.gmra.mxu0 %v44
    %v325 = vpop.f32.mrf.mxu0
    %v326 = vadd.f32 %v303, %v325
    %327 = vmatmul.f32.gmra.mxu0 %v51
    %v328 = vpop.f32.mrf.mxu0
    %v329 = vadd.f32 %v306, %v328
    %330 = vdwg.mxu0
    %331 = vmatpush.msra.mxu0 %v216
    %332 = vmatpush.msra.mxu0 %v215
    %333 = vmatpush.msra.mxu0 %v214
    %334 = vmatpush.msra.mxu0 %v213
    %335 = vmatpush.msra.mxu0 %v212
    %336 = vmatpush.msra.mxu0 %v211
    %337 = vmatpush.msra.mxu0 %v210
    %338 = vmatpush.msra.mxu0 %v209
    %339 = vmatpush.msra.mxu0 %v208
    %340 = vmatpush.msra.mxu0 %v207
    %341 = vmatpush.msra.mxu0 %v206
    %342 = vmatpush.msra.mxu0 %v205
    %343 = vmatpush.msra.mxu0 %v204
    %344 = vmatpush.msra.mxu0 %v203
    %345 = vmatpush.msra.mxu0 %v202
    %346 = vmatpush.msra.mxu0 %v201
    %347 = vmatmul.f32.gmra.mxu0 %v45
    %v348 = vpop.f32.mrf.mxu0
    %v349 = vadd.f32 %v326, %v348
    %350 = vmatmul.f32.gmra.mxu0 %v52
    %v351 = vpop.f32.mrf.mxu0
    %v352 = vadd.f32 %v329, %v351
    %353 = vdwg.mxu0
    %354 = vmatpush.msra.mxu0 %v232
    %355 = vmatpush.msra.mxu0 %v231
    %356 = vmatpush.msra.mxu0 %v230
    %357 = vmatpush.msra.mxu0 %v229
    %358 = vmatpush.msra.mxu0 %v228
    %359 = vmatpush.msra.mxu0 %v227
    %360 = vmatpush.msra.mxu0 %v226
    %361 = vmatpush.msra.mxu0 %v225
    %362 = vmatpush.msra.mxu0 %v224
    %363 = vmatpush.msra.mxu0 %v223
    %364 = vmatpush.msra.mxu0 %v222
    %365 = vmatpush.msra.mxu0 %v221
    %366 = vmatpush.msra.mxu0 %v220
    %367 = vmatpush.msra.mxu0 %v219
    %368 = vmatpush.msra.mxu0 %v218
    %369 = vmatpush.msra.mxu0 %v217
    %370 = vmatmul.f32.gmra.mxu0 %v46
    %v371 = vpop.f32.mrf.mxu0
    %v372 = vadd.f32 %v349, %v371
    %373 = vmatmul.f32.gmra.mxu0 %v53
    %v374 = vpop.f32.mrf.mxu0
    %v375 = vadd.f32 %v352, %v374
    %376 = vdwg.mxu0
    %377 = vmatpush.msra.mxu0 %v248
    %378 = vmatpush.msra.mxu0 %v247
    %379 = vmatpush.msra.mxu0 %v246
    %380 = vmatpush.msra.mxu0 %v245
    %381 = vmatpush.msra.mxu0 %v244
    %382 = vmatpush.msra.mxu0 %v243
    %383 = vmatpush.msra.mxu0 %v242
    %384 = vmatpush.msra.mxu0 %v241
    %385 = vmatpush.msra.mxu0 %v240
    %386 = vmatpush.msra.mxu0 %v239
    %387 = vmatpush.msra.mxu0 %v238
    %388 = vmatpush.msra.mxu0 %v237
    %389 = vmatpush.msra.mxu0 %v236
    %390 = vmatpush.msra.mxu0 %v235
    %391 = vmatpush.msra.mxu0 %v234
    %392 = vmatpush.msra.mxu0 %v233
    %393 = vmatmul.f32.gmra.mxu0 %v47
    %v394 = vpop.f32.mrf.mxu0
    %v395 = vadd.f32 %v372, %v394
    %396 = vmatmul.f32.gmra.mxu0 %v54
    %v397 = vpop.f32.mrf.mxu0
    %v398 = vadd.f32 %v375, %v397
    %399 = vdwg.mxu0
    %400 = vmatpush.msra.mxu0 %v264
    %401 = vmatpush.msra.mxu0 %v263
    %402 = vmatpush.msra.mxu0 %v262
    %403 = vmatpush.msra.mxu0 %v261
    %404 = vmatpush.msra.mxu0 %v260
    %405 = vmatpush.msra.mxu0 %v259
    %406 = vmatpush.msra.mxu0 %v258
    %407 = vmatpush.msra.mxu0 %v257
    %408 = vmatpush.msra.mxu0 %v256
    %409 = vmatpush.msra.mxu0 %v255
    %410 = vmatpush.msra.mxu0 %v254
    %411 = vmatpush.msra.mxu0 %v253
    %412 = vmatpush.msra.mxu0 %v252
    %413 = vmatpush.msra.mxu0 %v251
    %414 = vmatpush.msra.mxu0 %v250
    %415 = vmatpush.msra.mxu0 %v249
    %416 = vmatmul.f32.gmra.mxu0 %v48
    %v417 = vpop.f32.mrf.mxu0
    %v418 = vadd.f32 %v395, %v417
    %419 = vmatmul.f32.gmra.mxu0 %v55
    %v420 = vpop.f32.mrf.mxu0
    %v421 = vadd.f32 %v398, %v420
    %422 = vdwg.mxu0
    %423 = vmatpush.msra.mxu0 %v280
    %424 = vmatpush.msra.mxu0 %v279
    %425 = vmatpush.msra.mxu0 %v278
    %426 = vmatpush.msra.mxu0 %v277
    %427 = vmatpush.msra.mxu0 %v276
    %428 = vmatpush.msra.mxu0 %v275
    %429 = vmatpush.msra.mxu0 %v274
    %430 = vmatpush.msra.mxu0 %v273
    %431 = vmatpush.msra.mxu0 %v272
    %432 = vmatpush.msra.mxu0 %v271
    %433 = vmatpush.msra.mxu0 %v270
    %434 = vmatpush.msra.mxu0 %v269
    %435 = vmatpush.msra.mxu0 %v268
    %436 = vmatpush.msra.mxu0 %v267
    %437 = vmatpush.msra.mxu0 %v266
    %438 = vmatpush.msra.mxu0 %v265
    %439 = vmatmul.f32.gmra.mxu0 %v49
    %v440 = vpop.f32.mrf.mxu0
    %v441 = vadd.f32 %v418, %v440
    %442 = vmatmul.f32.gmra.mxu0 %v56
    %v443 = vpop.f32.mrf.mxu0
    %v444 = vadd.f32 %v421, %v443
    %445 = vdwg.mxu0
    %v446 = vmax.f32 %v441, 0.0
    %v447 = vmax.f32 %v444, 0.0
    %v448 = vld [vmem:[%s3] sm:$0xf]
    %v449 = vld [vmem:[%s3 + $0x4] sm:$0xf]
    %v450 = vld [vmem:[%s3 + $0x8] sm:$0xf]
    %v451 = vld [vmem:[%s3 + $0xc] sm:$0xf]
    %v452 = vld [vmem:[%s3 + $0x10] sm:$0xf]
    %v453 = vld [vmem:[%s3 + $0x14] sm:$0xf]
    %v454 = vld [vmem:[%s3 + $0x18] sm:$0xf]
    %v455 = vld [vmem:[%s3 + $0x1c] sm:$0xf]
    %v456 = vld [vmem:[%s3 + $0x20] sm:$0xf]
    %v457 = vld [vmem:[%s3 + $0x24] sm:$0xf]
    %v458 = vld [vmem:[%s3 + $0x28] sm:$0xf]
    %v459 = vld [vmem:[%s3 + $0x2c] sm:$0xf]
    %v460 = vld [vmem:[%s3 + $0x30] sm:$0xf]
    %v461 = vld [vmem:[%s3 + $0x34] sm:$0xf]
    %v462 = vld [vmem:[%s3 + $0x38] sm:$0xf]
    %v463 = vld [vmem:[%s3 + $0x3c] sm:$0xf]
    %v464 = vunpack.c.l.bf16 %v448
    %v465 = vunpack.c.l.bf16 %v449
    %v466 = vunpack.c.l.bf16 %v450
    %v467 = vunpack.c.l.bf16 %v451
    %v468 = vunpack.c.l.bf16 %v452
    %v469 = vunpack.c.l.bf16 %v453
    %v470 = vunpack.c.l.bf16 %v454
    %v471 = vunpack.c.l.bf16 %v455
    %v472 = vunpack.c.l.bf16 %v456
    %v473 = vunpack.c.l.bf16 %v457
    %v474 = vunpack.c.l.bf16 %v458
    %v475 = vunpack.c.l.bf16 %v459
    %v476 = vunpack.c.l.bf16 %v460
    %v477 = vunpack.c.l.bf16 %v461
    %v478 = vunpack.c.l.bf16 %v462
    %v479 = vunpack.c.l.bf16 %v463
    %v480 = vld [vmem:[%s4] sm:$0x1]
    %v482 = vperm.slane %v480, 0
    %484 = vmatpush.msra.mxu0 %v479
    %485 = vmatpush.msra.mxu0 %v478
    %486 = vmatpush.msra.mxu0 %v477
    %487 = vmatpush.msra.mxu0 %v476
    %488 = vmatpush.msra.mxu0 %v475
    %489 = vmatpush.msra.mxu0 %v474
    %490 = vmatpush.msra.mxu0 %v473
    %491 = vmatpush.msra.mxu0 %v472
    %492 = vmatpush.msra.mxu0 %v471
    %493 = vmatpush.msra.mxu0 %v470
    %494 = vmatpush.msra.mxu0 %v469
    %495 = vmatpush.msra.mxu0 %v468
    %496 = vmatpush.msra.mxu0 %v467
    %497 = vmatpush.msra.mxu0 %v466
    %498 = vmatpush.msra.mxu0 %v465
    %499 = vmatpush.msra.mxu0 %v464
    %500 = vmatmul.f32.gmra.mxu0 %v446
    %v501 = vpop.f32.mrf.mxu0
    %v502 = vadd.f32 %v482, %v501
    %503 = vmatmul.f32.gmra.mxu0 %v447
    %v504 = vpop.f32.mrf.mxu0
    %v505 = vadd.f32 %v482, %v504
    %506 = vdwg.mxu0
    %v507 = vmax.f32 %v502, 0.0
    %v508 = vmax.f32 %v505, 0.0
    %v509 = vld [vmem:[%s5] sm:$0xf]
    %v510 = vld [vmem:[%s5 + $0x4] sm:$0xf]
    %v511 = vld [vmem:[%s5 + $0x8] sm:$0xf]
    %v512 = vld [vmem:[%s5 + $0xc] sm:$0xf]
    %v513 = vld [vmem:[%s5 + $0x10] sm:$0xf]
    %v514 = vld [vmem:[%s5 + $0x14] sm:$0xf]
    %v515 = vld [vmem:[%s5 + $0x18] sm:$0xf]
    %v516 = vld [vmem:[%s5 + $0x1c] sm:$0xf]
    %v517 = vunpack.c.l.bf16 %v509
    %v518 = vunpack.c.l.bf16 %v510
    %v519 = vunpack.c.l.bf16 %v511
    %v520 = vunpack.c.l.bf16 %v512
    %v521 = vunpack.c.l.bf16 %v513
    %v522 = vunpack.c.l.bf16 %v514
    %v523 = vunpack.c.l.bf16 %v515
    %v524 = vunpack.c.l.bf16 %v516
    %v525 = vld [vmem:[%s6] sm:$0x1]
    %v527 = vperm.slane %v525, 0
    %vm529 = vcmask 523264
    %v531 = vsel %vm529, %v507, 0
    %v534 = vsel %vm529, %v508, 0
    %536 = vmatpush.msra.mxu0 0.0
    %537 = vmatpush.msra.mxu0 0.0
    %538 = vmatpush.msra.mxu0 0.0
    %539 = vmatpush.msra.mxu0 0.0
    %540 = vmatpush.msra.mxu0 0.0
    %541 = vmatpush.msra.mxu0 0.0
    %542 = vmatpush.msra.mxu0 0.0
    %543 = vmatpush.msra.mxu0 0.0
    %544 = vmatpush.msra.mxu0 %v524
    %545 = vmatpush.msra.mxu0 %v523
    %546 = vmatpush.msra.mxu0 %v522
    %547 = vmatpush.msra.mxu0 %v521
    %548 = vmatpush.msra.mxu0 %v520
    %549 = vmatpush.msra.mxu0 %v519
    %550 = vmatpush.msra.mxu0 %v518
    %551 = vmatpush.msra.mxu0 %v517
    %552 = vmatmul.f32.gmra.mxu0 %v531
    %v553 = vpop.f32.mrf.mxu0
    %v554 = vadd.f32 %v527, %v553
    %555 = vmatmul.f32.gmra.mxu0 %v534
    %v556 = vpop.f32.mrf.mxu0
    %v557 = vadd.f32 %v527, %v556
    %558 = vdwg.mxu0
    %v559 = vmax.f32 %v554, 0.0
    %v560 = vmax.f32 %v557, 0.0
    %vm561 = vcmask 80896
    %562 = vst.msk [vmem:[#allocation5] sm:$0xff] %vm561, %v559
    %563 = vst.msk [vmem:[#allocation5 + $0x8] sm:$0xff] %vm561, %v560
    // Predicated region
    $region34: #{tpu_custom_call.1} parent=1 // pred_check
      _
    $region35: #{tpu_custom_call.1} parent=1 // pred_check_branch
      %565 = sbr.rel (0) target = $region37
    $region36: #{tpu_custom_call.1} parent=1 // pred_region
      %567 = vsyncadd [#allocation4], 0
      %s568 = sshll.u32 [#allocation5], 4
      %s569 = int_to_ptr.vmem [resolvable:$true] %s568
      %s570 = sshll.u32 %s7, 4
      %s571 = int_to_ptr.hbm [resolvable:$true] %s570
      %576 = dma.vmem_to_hbm [thread:$0]  %s569, 256, %s571, [#allocation4], 128, 128, 8
    $region37: #{tpu_custom_call.1} parent=1 // pred_fallthru
      _
    // Predicated region
    $region38: #{tpu_custom_call.1} parent=1 // pred_check
      _
    $region39: #{tpu_custom_call.1} parent=1 // pred_check_branch
      %578 = sbr.rel (0) target = $region41
    $region40: #{tpu_custom_call.1} parent=1 // pred_region
      %580 = dma.done [#allocation4], 256
    $region41: #{tpu_custom_call.1} parent=1 // pred_fallthru
      _
    %581 = vsyncpa [#allocation3], 1
    %582 = vsyncpa [#allocation4], 1

</llo_original>
